<compile_context>
chip_gen: v7x
topology: tpu7x:2x2x1
jax: 0.10.0
libtpu: 0.0.40
codegen_flags: <defaults>
</compile_context>

<pallas_src>
import functools

import jax
import jax.numpy as jnp
from jax.experimental import pallas as pl
from jax.experimental.pallas import tpu as pltpu


def _round_up(x, m):
    return (x + m - 1) // m * m


def _vmem_budget_bytes():
    """Generation-aware working-set budget (v7x: 64 MiB VMEM, v5e/v6e: 128 MiB)."""
    cap = 128 * 1024 * 1024
    try:
        info = pltpu.get_tpu_info()
        cap = getattr(info, "vmem_capacity_bytes", cap) or cap
    except Exception:
        pass
    # Use at most half of physical VMEM for our explicit (double-buffered)
    # working set; leaves headroom for compiler scratch.
    return int(min(cap // 2, 64 * 1024 * 1024))


# --------------------------- kernels ---------------------------

def _resident_w_kernel(x_ref, w_ref, b_ref, o_ref):
    """y = x @ W' + b' with W' fully VMEM-resident (constant index map).

    Single grid axis over batch tiles: one MXU matmul + lane-dense bias add per
    step.  No accumulator scratch, no init/finalize.
    """
    o_ref[...] = (
        jnp.dot(x_ref[...], w_ref[...], preferred_element_type=jnp.float32)
        + b_ref[...]
    ).astype(o_ref.dtype)


def _ktiled_kernel(x_ref, w_ref, b_ref, o_ref):
    """K-tiled y = x @ W' + b', accumulating directly into the f32 output block.

    The output block index is constant across k, so o_ref stays VMEM-resident
    over the reduction; it is initialized with the bias at k == 0 (no scratch
    accumulator, no finalize copy).
    """
    k = pl.program_id(1)

    @pl.when(k == 0)
    def _init():
        o_ref[...] = jnp.broadcast_to(b_ref[...], o_ref.shape).astype(o_ref.dtype)

    o_ref[...] += jnp.dot(
        x_ref[...], w_ref[...], preferred_element_type=jnp.float32
    )


# ----------------------- parameter setup -----------------------

def fold_normalization_into_linear(mean_c, std_c, w, b, hw,
                                   compute_dtype=jnp.float32):
    """One-time constant fold of the normalization into the linear head.

    mean_c/std_c: [C] per-channel stats; w: [D, O] with D = C*hw (NCHW flatten
    order, matching torch's Flatten); b: [O].
    Returns (w_folded [D, O_pad] in `compute_dtype`, b_folded [1, O_pad] f32, O)
    with O padded to a multiple of 128 so output stores are lane-dense.
    """
    D, O = w.shape
    inv_std = jnp.repeat(1.0 / std_c.astype(jnp.float32), hw)   # [D]
    mean = jnp.repeat(mean_c.astype(jnp.float32), hw)           # [D]

    w_f32 = w.astype(jnp.float32)
    w_folded = w_f32 * inv_std[:, None]                         # W' = W / std
    # b' = b - (mean/std) @ W  — done once, at highest f32 precision.
    b_folded = b.astype(jnp.float32) - jnp.dot(
        mean * inv_std, w_f32, precision=jax.lax.Precision.HIGHEST)

    O_pad = _round_up(max(O, 128), 128)
    if O_pad != O:
        w_folded = jnp.pad(w_folded, ((0, 0), (0, O_pad - O)))
        b_folded = jnp.pad(b_folded, (0, O_pad - O))

    # Only the streamed matmul operand is cast; bias / accumulation stay f32.
    w_folded = w_folded.astype(compute_dtype)
    return w_folded, b_folded.reshape(1, O_pad).astype(jnp.float32), O


# --------------------------- forward ---------------------------

@functools.partial(jax.jit, static_argnames=("out_dim",))
def normalization_forward(x_nchw, w_folded, b_folded, out_dim):
    """forward(x) = Linear((x - mean)/std), with the norm folded into W'/b'."""
    B = x_nchw.shape[0]
    D, O_pad = w_folded.shape
    cdt = w_folded.dtype
    itemsize = jnp.dtype(cdt).itemsize
    sublane = 16 if itemsize == 2 else 8          # bf16 packs 16 rows / vreg

    x_flat = x_nchw.reshape(B, -1).astype(cdt)    # torch NCHW flatten order
    budget = _vmem_budget_bytes()

    # Batch tile: up to 256 rows (fills the 256-wide MXU on v6e/v7x and, in the
    # streamed-W path, maximizes FLOPs amortized per weight byte).
    TB = min(256, _round_up(B, sublane))

    def resident_bytes(tb):
        # 2x x (double buffer), 2x W (conservative), 2x f32 output tile.
        return 2 * (tb * D + D * O_pad) * itemsize + 2 * tb * O_pad * 4

    while TB > sublane and resident_bytes(TB) > budget:
        TB = max(sublane, TB // 2)

    if resident_bytes(TB) <= budget:
        # ---- path A: W fully VMEM-resident, single (batch) grid axis ----
        B_pad = _round_up(B, TB)
        if B_pad != B:
            x_flat = jnp.pad(x_flat, ((0, B_pad - B), (0, 0)))

        out = pl.pallas_call(
            _resident_w_kernel,
            out_shape=jax.ShapeDtypeStruct((B_pad, O_pad), jnp.float32),
            grid_spec=pltpu.PrefetchScalarGridSpec(
                num_scalar_prefetch=0,
                grid=(B_pad // TB,),
                in_specs=[
                    pl.BlockSpec((TB, D), lambda i: (i, 0)),      # x tile
                    pl.BlockSpec((D, O_pad), lambda i: (0, 0)),   # W' (resident)
                    pl.BlockSpec((1, O_pad), lambda i: (0, 0)),   # b' (lane-dense)
                ],
                out_specs=pl.BlockSpec((TB, O_pad), lambda i: (i, 0)),
            ),
            compiler_params=pltpu.CompilerParams(
                dimension_semantics=("parallel",),
                vmem_limit_bytes=budget,
            ),
        )(x_flat, w_folded, b_folded)
    else:
        # ---- path B: stream W with VMEM-budget-driven K tiles ----
        def ktiled_bytes(tb, tk):
            return 2 * (tb * tk + tk * O_pad) * itemsize + 2 * tb * O_pad * 4

        d_cap = _round_up(D, 128)
        TK = None
        while TK is None:
            for cand in (8192, 4096, 2048, 1024, 512, 256, 128):
                if cand <= d_cap and ktiled_bytes(TB, cand) <= budget:
                    TK = cand
                    break
            if TK is None:
                if TB == sublane:
                    TK = 128          # minimal legal tile
                else:
                    TB = max(sublane, TB // 2)

        B_pad = _round_up(B, TB)
        D_pad = _round_up(D, TK)      # pad K instead of falling back to TK=D
        # TODO(synk): for production, fold the D padding into parameter setup
        # so the weight pad is not re-materialized per call.
        x_pad = jnp.pad(x_flat, ((0, B_pad - B), (0, D_pad - D)))
        w_pad = jnp.pad(w_folded, ((0, D_pad - D), (0, 0)))
        grid = (B_pad // TB, D_pad // TK)     # reduction axis last

        out = pl.pallas_call(
            _ktiled_kernel,
            out_shape=jax.ShapeDtypeStruct((B_pad, O_pad), jnp.float32),
            grid_spec=pltpu.PrefetchScalarGridSpec(
                num_scalar_prefetch=0,
                grid=grid,
                in_specs=[
                    pl.BlockSpec((TB, TK), lambda i, k: (i, k)),      # x tile
                    pl.BlockSpec((TK, O_pad), lambda i, k: (k, 0)),   # W' tile
                    pl.BlockSpec((1, O_pad), lambda i, k: (0, 0)),    # b'
                ],
                out_specs=pl.BlockSpec((TB, O_pad), lambda i, k: (i, 0)),
            ),
            compiler_params=pltpu.CompilerParams(
                dimension_semantics=("parallel", "arbitrary"),
                vmem_limit_bytes=budget,
            ),
        )(x_pad, w_pad, b_folded)

    return out[:B, :out_dim]


def reference_forward(x_nchw, mean_c, std_c, w, b):
    B, C, H, W = x_nchw.shape
    xn = (x_nchw - mean_c.reshape(1, C, 1, 1)) / std_c.reshape(1, C, 1, 1)
    return xn.reshape(B, -1) @ w + b


if __name__ == "__main__":
    key = jax.random.PRNGKey(0)
    B, C, H, W = 2, 4, 16, 16
    D = C * H * W
    OUT = 32

    kx, kw, kb = jax.random.split(key, 3)
    x = jax.random.normal(kx, (B, C, H, W), dtype=jnp.float32)

    # Deterministic per-channel normalization constants (CIFAR-like).
    mean_c = jnp.array([0.4914, 0.4822, 0.4465, 0.5000], dtype=jnp.float32)
    std_c = jnp.array([0.2470, 0.2435, 0.2616, 0.2500], dtype=jnp.float32)

    # Deterministic "model": a single Linear(D, OUT).
    w = jax.random.normal(kw, (D, OUT), dtype=jnp.float32) * 0.02
    b = jax.random.normal(kb, (OUT,), dtype=jnp.float32) * 0.01

    ref = reference_forward(x, mean_c, std_c, w, b)

    # f32 streaming: tight tolerance.
    w_f32, b_f32, out_dim = fold_normalization_into_linear(
        mean_c, std_c, w, b, H * W)
    out = jax.block_until_ready(normalization_forward(x, w_f32, b_f32, out_dim))
    assert out.shape == (B, OUT)
    assert jnp.allclose(out, ref, atol=2e-4, rtol=2e-4), "f32 mismatch vs reference"

    # bf16 streaming of x / W' (halves the dominant HBM bytes); bias and MXU
    # accumulation stay f32, so only input quantization error remains.
    w_b16, b_b16, out_dim = fold_normalization_into_linear(
        mean_c, std_c, w, b, H * W, compute_dtype=jnp.bfloat16)
    out_b16 = jax.block_until_ready(
        normalization_forward(x, w_b16, b_b16, out_dim))
    assert out_b16.shape == (B, OUT)
    assert jnp.allclose(out_b16, ref, atol=5e-2, rtol=5e-2), "bf16 mismatch vs reference"

    print("KERNEL_OK")
</pallas_src>

<mosaic_0001>
module attributes {stable_mosaic.version = 11 : i64} {
  func.func @_resident_w_kernel(%arg0: i32, %arg1: memref<8x1024xf32, #tpu.memory_space<vmem>>, %arg2: memref<1024x128xf32, #tpu.memory_space<vmem>>, %arg3: memref<1x128xf32, #tpu.memory_space<vmem>>, %arg4: memref<8x128xf32, #tpu.memory_space<vmem>>) attributes {dimension_semantics = [#tpu.dimension_semantics<parallel>], iteration_bounds = array<i64: 1>, scalar_prefetch = 0 : i64, scratch_operands = 0 : i64, tpu.core_type = #tpu.core_type<tc>, window_params = [{transform_indices = @transform_0, window_bounds = array<i64: 8, 1024>}, {pipeline_mode = #tpu.pipeline_mode<synchronous>, transform_indices = @transform_1, window_bounds = array<i64: 1024, 128>}, {pipeline_mode = #tpu.pipeline_mode<synchronous>, transform_indices = @transform_2, window_bounds = array<i64: 1, 128>}, {transform_indices = @transform_3, window_bounds = array<i64: 8, 128>}]} {
    %c0 = arith.constant 0 : index
    %c0_0 = arith.constant 0 : index
    %0 = vector.load %arg1[%c0, %c0_0] : memref<8x1024xf32, #tpu.memory_space<vmem>>, vector<8x1024xf32>
    %c0_1 = arith.constant 0 : index
    %c0_2 = arith.constant 0 : index
    %1 = vector.load %arg2[%c0_1, %c0_2] : memref<1024x128xf32, #tpu.memory_space<vmem>>, vector<1024x128xf32>
    %cst = arith.constant dense<0.000000e+00> : vector<8x128xf32>
    %2 = tpu.matmul %0, %1, %cst {dimension_numbers = #tpu.dot_dimension_numbers<[1], [0], [0], [1], [0, 0, 1, 1], [], []>} : vector<8x1024xf32>, vector<1024x128xf32>, vector<8x128xf32> -> vector<8x128xf32>
    %c0_3 = arith.constant 0 : index
    %c0_4 = arith.constant 0 : index
    %3 = vector.load %arg3[%c0_3, %c0_4] : memref<1x128xf32, #tpu.memory_space<vmem>>, vector<1x128xf32>
    %4 = vector.broadcast %3 : vector<1x128xf32> to vector<8x128xf32>
    %5 = arith.addf %2, %4 : vector<8x128xf32>
    %c0_5 = arith.constant 0 : index
    %c0_6 = arith.constant 0 : index
    %6 = vector.load %arg4[%c0_5, %c0_6] : memref<8x128xf32, #tpu.memory_space<vmem>>, vector<8x128xf32>
    tpu.vector_store %arg4[%c0_5, %c0_6], %5 {strides = array<i32>} : memref<8x128xf32, #tpu.memory_space<vmem>>, vector<8x128xf32>,
    return
  }
  func.func @transform_0(%arg0: i32) -> (i32, i32) {
    %c0_i32 = arith.constant 0 : i32
    %c0_i32_0 = arith.constant 0 : i32
    return %arg0, %c0_i32 : i32, i32
  }
  func.func @transform_1(%arg0: i32) -> (i32, i32) {
    %c0_i32 = arith.constant 0 : i32
    %c0_i32_0 = arith.constant 0 : i32
    %c0_i32_1 = arith.constant 0 : i32
    return %c0_i32, %c0_i32_0 : i32, i32
  }
  func.func @transform_2(%arg0: i32) -> (i32, i32) {
    %c0_i32 = arith.constant 0 : i32
    %c0_i32_0 = arith.constant 0 : i32
    %c0_i32_1 = arith.constant 0 : i32
    return %c0_i32, %c0_i32_0 : i32, i32
  }
  func.func @transform_3(%arg0: i32) -> (i32, i32) {
    %c0_i32 = arith.constant 0 : i32
    %c0_i32_0 = arith.constant 0 : i32
    return %arg0, %c0_i32 : i32, i32
  }
}

</mosaic_0001>

<llo_original>
// kernel: normalization_forward.1
$region0: #{normalization_forward.1}
  #allocation0 [shape = 'u32[]', space=smem, size = 0x4, offset = 0x4, fixed_abs, tag = 'smem constant byte address 0x4 - core index']
  #allocation1 [shape = 'u32[144,128]{1,0:T(1,128)}', space=vmem, size = 0x12000, scoped, tag = 'internal scratch']
  %s0 = inlined_call_operand.hbm [shape: f32[8,1024], index: 0, kind: input, shape index: {}]
  %s1 = inlined_call_operand.hbm [shape: f32[1024,128], index: 1, kind: input, shape index: {}]
  %s2 = inlined_call_operand.hbm [shape: f32[1,128], index: 2, kind: input, shape index: {}]
  %s3 = inlined_call_operand.hbm [shape: f32[8,128], index: 3, kind: output, shape index: {}]
  %s4 = sld [smem:[#allocation0]]
  $region34: #{normalization_forward.1} parent=0
    _
  %s6 = ssub.s32 1, %s4
  %s7 = scalar_select 0, %s6, %s4
  $region1: #{normalization_forward.1} parent=0
    #allocation2 [shape = 'u8[32768]{0}', space=vmem, size = 0x8000, scoped, tag = 'input window, operand 0, single buffered']
    #allocation3 [shape = 's32[1]{0}', space=sflag, size = 0x4, scoped, tag = 'scoped memory for normalization_forward.1']
    #allocation4 [shape = 's32[1]{0}', space=sflag, size = 0x4, scoped, tag = 'scoped memory for normalization_forward.1']
    #allocation5 [shape = 'u8[524288]{0}', space=vmem, size = 0x80000, scoped, tag = 'input window, operand 1, single buffered']
    #allocation6 [shape = 's32[1]{0}', space=sflag, size = 0x4, scoped, tag = 'scoped memory for normalization_forward.1']
    #allocation7 [shape = 'u8[512]{0}', space=vmem, size = 0x400, scoped, tag = 'input window, operand 2, single buffered']
    #allocation8 [shape = 'u8[4096]{0}', space=vmem, size = 0x1000, scoped, tag = 'output window, operand 0, single buffered']
    %8 = vsyncpa [#allocation3], 0
    %9 = vsyncpa [#allocation6], 0
    %10 = vsyncpa [#allocation4], 0
    // Predicated region
    $region2: #{normalization_forward.1} parent=1 // pred_check
      _
    $region3: #{normalization_forward.1} parent=1 // pred_check_branch
      %12 = sbr.rel (0) target = $region5
    $region4: #{normalization_forward.1} parent=1 // pred_region
      %s14 = ssub.s32 1024, 1024
      %15 = vsyncadd [#allocation3], %s14
      %s17 = sshll.u32 [#allocation2], 4
      %s18 = int_to_ptr.vmem [resolvable:$true] %s17
      %20 = dma.hbm_to_vmem [thread:$0]  %s0, 1024, %s18, [#allocation3]
    $region5: #{normalization_forward.1} parent=1 // pred_fallthru
      _
    // Predicated region
    $region6: #{normalization_forward.1} parent=1 // pred_check
      _
    $region7: #{normalization_forward.1} parent=1 // pred_check_branch
      %22 = sbr.rel (0) target = $region9
    $region8: #{normalization_forward.1} parent=1 // pred_region
      %s24 = ssub.s32 16384, 16384
      %25 = vsyncadd [#allocation6], %s24
      %s26 = sshll.u32 [#allocation5], 4
      %s27 = int_to_ptr.vmem [resolvable:$true] %s26
      %32 = dma.hbm_to_vmem [thread:$0]  %s1, 16384, %s27, [#allocation6], 128, 128, 8
    $region9: #{normalization_forward.1} parent=1 // pred_fallthru
      _
    // Predicated region
    $region10: #{normalization_forward.1} parent=1 // pred_check
      _
    $region11: #{normalization_forward.1} parent=1 // pred_check_branch
      %34 = sbr.rel (0) target = $region13
    $region12: #{normalization_forward.1} parent=1 // pred_region
      %s36 = ssub.s32 16, 16
      %37 = vsyncadd [#allocation6], %s36
      %s39 = sshll.u32 [#allocation7], 4
      %s40 = int_to_ptr.vmem [resolvable:$true] %s39
      %42 = dma.hbm_to_vmem [thread:$0]  %s2, 16, %s40, [#allocation6]
    $region13: #{normalization_forward.1} parent=1 // pred_fallthru
      _
    // Predicated region
    $region14: #{normalization_forward.1} parent=1 // pred_check
      _
    $region15: #{normalization_forward.1} parent=1 // pred_check_branch
      %44 = sbr.rel (0) target = $region17
    $region16: #{normalization_forward.1} parent=1 // pred_region
      %45 = dma.done [#allocation3], 1024
    $region17: #{normalization_forward.1} parent=1 // pred_fallthru
      _
    // Predicated region
    $region18: #{normalization_forward.1} parent=1 // pred_check
      _
    $region19: #{normalization_forward.1} parent=1 // pred_check_branch
      %47 = sbr.rel (0) target = $region21
    $region20: #{normalization_forward.1} parent=1 // pred_region
      %48 = dma.done [#allocation6], 16384
    $region21: #{normalization_forward.1} parent=1 // pred_fallthru
      _
    // Predicated region
    $region22: #{normalization_forward.1} parent=1 // pred_check
      _
    $region23: #{normalization_forward.1} parent=1 // pred_check_branch
      %50 = sbr.rel (0) target = $region25
    $region24: #{normalization_forward.1} parent=1 // pred_region
      %51 = dma.done [#allocation6], 16
    $region25: #{normalization_forward.1} parent=1 // pred_fallthru
      _
    %v52 = vld [vmem:[#allocation2] sm:$0xff]
    %v53 = vld [vmem:[#allocation2 + $0x8] sm:$0xff]
    %v54 = vld [vmem:[#allocation2 + $0x10] sm:$0xff]
    %v55 = vld [vmem:[#allocation2 + $0x18] sm:$0xff]
    %v56 = vld [vmem:[#allocation2 + $0x20] sm:$0xff]
    %v57 = vld [vmem:[#allocation2 + $0x28] sm:$0xff]
    %v58 = vld [vmem:[#allocation2 + $0x30] sm:$0xff]
    %v59 = vld [vmem:[#allocation2 + $0x38] sm:$0xff]
    %v60 = vld [vmem:[#allocation5] sm:$0xff]
    %v61 = vld [vmem:[#allocation5 + $0x8] sm:$0xff]
    %v62 = vld [vmem:[#allocation5 + $0x10] sm:$0xff]
    %v63 = vld [vmem:[#allocation5 + $0x18] sm:$0xff]
    %v64 = vld [vmem:[#allocation5 + $0x20] sm:$0xff]
    %v65 = vld [vmem:[#allocation5 + $0x28] sm:$0xff]
    %v66 = vld [vmem:[#allocation5 + $0x30] sm:$0xff]
    %v67 = vld [vmem:[#allocation5 + $0x38] sm:$0xff]
    %v68 = vld [vmem:[#allocation5 + $0x40] sm:$0xff]
    %v69 = vld [vmem:[#allocation5 + $0x48] sm:$0xff]
    %v70 = vld [vmem:[#allocation5 + $0x50] sm:$0xff]
    %v71 = vld [vmem:[#allocation5 + $0x58] sm:$0xff]
    %v72 = vld [vmem:[#allocation5 + $0x60] sm:$0xff]
    %v73 = vld [vmem:[#allocation5 + $0x68] sm:$0xff]
    %v74 = vld [vmem:[#allocation5 + $0x70] sm:$0xff]
    %v75 = vld [vmem:[#allocation5 + $0x78] sm:$0xff]
    %v76 = vld [vmem:[#allocation5 + $0x80] sm:$0xff]
    %v77 = vld [vmem:[#allocation5 + $0x88] sm:$0xff]
    %v78 = vld [vmem:[#allocation5 + $0x90] sm:$0xff]
    %v79 = vld [vmem:[#allocation5 + $0x98] sm:$0xff]
    %v80 = vld [vmem:[#allocation5 + $0xa0] sm:$0xff]
    %v81 = vld [vmem:[#allocation5 + $0xa8] sm:$0xff]
    %v82 = vld [vmem:[#allocation5 + $0xb0] sm:$0xff]
    %v83 = vld [vmem:[#allocation5 + $0xb8] sm:$0xff]
    %v84 = vld [vmem:[#allocation5 + $0xc0] sm:$0xff]
    %v85 = vld [vmem:[#allocation5 + $0xc8] sm:$0xff]
    %v86 = vld [vmem:[#allocation5 + $0xd0] sm:$0xff]
    %v87 = vld [vmem:[#allocation5 + $0xd8] sm:$0xff]
    %v88 = vld [vmem:[#allocation5 + $0xe0] sm:$0xff]
    %v89 = vld [vmem:[#allocation5 + $0xe8] sm:$0xff]
    %v90 = vld [vmem:[#allocation5 + $0xf0] sm:$0xff]
    %v91 = vld [vmem:[#allocation5 + $0xf8] sm:$0xff]
    %v92 = vld [vmem:[#allocation5 + $0x100] sm:$0xff]
    %v93 = vld [vmem:[#allocation5 + $0x108] sm:$0xff]
    %v94 = vld [vmem:[#allocation5 + $0x110] sm:$0xff]
    %v95 = vld [vmem:[#allocation5 + $0x118] sm:$0xff]
    %v96 = vld [vmem:[#allocation5 + $0x120] sm:$0xff]
    %v97 = vld [vmem:[#allocation5 + $0x128] sm:$0xff]
    %v98 = vld [vmem:[#allocation5 + $0x130] sm:$0xff]
    %v99 = vld [vmem:[#allocation5 + $0x138] sm:$0xff]
    %v100 = vld [vmem:[#allocation5 + $0x140] sm:$0xff]
    %v101 = vld [vmem:[#allocation5 + $0x148] sm:$0xff]
    %v102 = vld [vmem:[#allocation5 + $0x150] sm:$0xff]
    %v103 = vld [vmem:[#allocation5 + $0x158] sm:$0xff]
    %v104 = vld [vmem:[#allocation5 + $0x160] sm:$0xff]
    %v105 = vld [vmem:[#allocation5 + $0x168] sm:$0xff]
    %v106 = vld [vmem:[#allocation5 + $0x170] sm:$0xff]
    %v107 = vld [vmem:[#allocation5 + $0x178] sm:$0xff]
    %v108 = vld [vmem:[#allocation5 + $0x180] sm:$0xff]
    %v109 = vld [vmem:[#allocation5 + $0x188] sm:$0xff]
    %v110 = vld [vmem:[#allocation5 + $0x190] sm:$0xff]
    %v111 = vld [vmem:[#allocation5 + $0x198] sm:$0xff]
    %v112 = vld [vmem:[#allocation5 + $0x1a0] sm:$0xff]
    %v113 = vld [vmem:[#allocation5 + $0x1a8] sm:$0xff]
    %v114 = vld [vmem:[#allocation5 + $0x1b0] sm:$0xff]
    %v115 = vld [vmem:[#allocation5 + $0x1b8] sm:$0xff]
    %v116 = vld [vmem:[#allocation5 + $0x1c0] sm:$0xff]
    %v117 = vld [vmem:[#allocation5 + $0x1c8] sm:$0xff]
    %v118 = vld [vmem:[#allocation5 + $0x1d0] sm:$0xff]
    %v119 = vld [vmem:[#allocation5 + $0x1d8] sm:$0xff]
    %v120 = vld [vmem:[#allocation5 + $0x1e0] sm:$0xff]
    %v121 = vld [vmem:[#allocation5 + $0x1e8] sm:$0xff]
    %v122 = vld [vmem:[#allocation5 + $0x1f0] sm:$0xff]
    %v123 = vld [vmem:[#allocation5 + $0x1f8] sm:$0xff]
    %v124 = vld [vmem:[#allocation5 + $0x200] sm:$0xff]
    %v125 = vld [vmem:[#allocation5 + $0x208] sm:$0xff]
    %v126 = vld [vmem:[#allocation5 + $0x210] sm:$0xff]
    %v127 = vld [vmem:[#allocation5 + $0x218] sm:$0xff]
    %v128 = vld [vmem:[#allocation5 + $0x220] sm:$0xff]
    %v129 = vld [vmem:[#allocation5 + $0x228] sm:$0xff]
    %v130 = vld [vmem:[#allocation5 + $0x230] sm:$0xff]
    %v131 = vld [vmem:[#allocation5 + $0x238] sm:$0xff]
    %v132 = vld [vmem:[#allocation5 + $0x240] sm:$0xff]
    %v133 = vld [vmem:[#allocation5 + $0x248] sm:$0xff]
    %v134 = vld [vmem:[#allocation5 + $0x250] sm:$0xff]
    %v135 = vld [vmem:[#allocation5 + $0x258] sm:$0xff]
    %v136 = vld [vmem:[#allocation5 + $0x260] sm:$0xff]
    %v137 = vld [vmem:[#allocation5 + $0x268] sm:$0xff]
    %v138 = vld [vmem:[#allocation5 + $0x270] sm:$0xff]
    %v139 = vld [vmem:[#allocation5 + $0x278] sm:$0xff]
    %v140 = vld [vmem:[#allocation5 + $0x280] sm:$0xff]
    %v141 = vld [vmem:[#allocation5 + $0x288] sm:$0xff]
    %v142 = vld [vmem:[#allocation5 + $0x290] sm:$0xff]
    %v143 = vld [vmem:[#allocation5 + $0x298] sm:$0xff]
    %v144 = vld [vmem:[#allocation5 + $0x2a0] sm:$0xff]
    %v145 = vld [vmem:[#allocation5 + $0x2a8] sm:$0xff]
    %v146 = vld [vmem:[#allocation5 + $0x2b0] sm:$0xff]
    %v147 = vld [vmem:[#allocation5 + $0x2b8] sm:$0xff]
    %v148 = vld [vmem:[#allocation5 + $0x2c0] sm:$0xff]
    %v149 = vld [vmem:[#allocation5 + $0x2c8] sm:$0xff]
    %v150 = vld [vmem:[#allocation5 + $0x2d0] sm:$0xff]
    %v151 = vld [vmem:[#allocation5 + $0x2d8] sm:$0xff]
    %v152 = vld [vmem:[#allocation5 + $0x2e0] sm:$0xff]
    %v153 = vld [vmem:[#allocation5 + $0x2e8] sm:$0xff]
    %v154 = vld [vmem:[#allocation5 + $0x2f0] sm:$0xff]
    %v155 = vld [vmem:[#allocation5 + $0x2f8] sm:$0xff]
    %v156 = vld [vmem:[#allocation5 + $0x300] sm:$0xff]
    %v157 = vld [vmem:[#allocation5 + $0x308] sm:$0xff]
    %v158 = vld [vmem:[#allocation5 + $0x310] sm:$0xff]
    %v159 = vld [vmem:[#allocation5 + $0x318] sm:$0xff]
    %v160 = vld [vmem:[#allocation5 + $0x320] sm:$0xff]
    %v161 = vld [vmem:[#allocation5 + $0x328] sm:$0xff]
    %v162 = vld [vmem:[#allocation5 + $0x330] sm:$0xff]
    %v163 = vld [vmem:[#allocation5 + $0x338] sm:$0xff]
    %v164 = vld [vmem:[#allocation5 + $0x340] sm:$0xff]
    %v165 = vld [vmem:[#allocation5 + $0x348] sm:$0xff]
    %v166 = vld [vmem:[#allocation5 + $0x350] sm:$0xff]
    %v167 = vld [vmem:[#allocation5 + $0x358] sm:$0xff]
    %v168 = vld [vmem:[#allocation5 + $0x360] sm:$0xff]
    %v169 = vld [vmem:[#allocation5 + $0x368] sm:$0xff]
    %v170 = vld [vmem:[#allocation5 + $0x370] sm:$0xff]
    %v171 = vld [vmem:[#allocation5 + $0x378] sm:$0xff]
    %v172 = vld [vmem:[#allocation5 + $0x380] sm:$0xff]
    %v173 = vld [vmem:[#allocation5 + $0x388] sm:$0xff]
    %v174 = vld [vmem:[#allocation5 + $0x390] sm:$0xff]
    %v175 = vld [vmem:[#allocation5 + $0x398] sm:$0xff]
    %v176 = vld [vmem:[#allocation5 + $0x3a0] sm:$0xff]
    %v177 = vld [vmem:[#allocation5 + $0x3a8] sm:$0xff]
    %v178 = vld [vmem:[#allocation5 + $0x3b0] sm:$0xff]
    %v179 = vld [vmem:[#allocation5 + $0x3b8] sm:$0xff]
    %v180 = vld [vmem:[#allocation5 + $0x3c0] sm:$0xff]
    %v181 = vld [vmem:[#allocation5 + $0x3c8] sm:$0xff]
    %v182 = vld [vmem:[#allocation5 + $0x3d0] sm:$0xff]
    %v183 = vld [vmem:[#allocation5 + $0x3d8] sm:$0xff]
    %v184 = vld [vmem:[#allocation5 + $0x3e0] sm:$0xff]
    %v185 = vld [vmem:[#allocation5 + $0x3e8] sm:$0xff]
    %v186 = vld [vmem:[#allocation5 + $0x3f0] sm:$0xff]
    %v187 = vld [vmem:[#allocation5 + $0x3f8] sm:$0xff]
    %v188 = vld [vmem:[#allocation7] sm:$0x1]
    %v190 = vlaneseq
    %v191 = vshrl.u32 %v190, 7
    %v192 = vsub.s32 0, %v191
    %v193 = vrot.slane %v188, %v192
    %195 = vmatprep.subr.mxu0 0.0
    %196 = vmatpush1.msra.mxu0 %v60
    %197 = vmatprep.subr.mxu0 0.0
    %198 = vmatpush1.msra.mxu0 %v61
    %199 = vmatprep.subr.mxu0 0.0
    %200 = vmatpush1.msra.mxu0 %v62
    %201 = vmatprep.subr.mxu0 0.0
    %202 = vmatpush1.msra.mxu0 %v63
    %203 = vmatprep.subr.mxu0 0.0
    %204 = vmatpush1.msra.mxu0 %v64
    %205 = vmatprep.subr.mxu0 0.0
    %206 = vmatpush1.msra.mxu0 %v65
    %207 = vmatprep.subr.mxu0 0.0
    %208 = vmatpush1.msra.mxu0 %v66
    %209 = vmatprep.subr.mxu0 0.0
    %210 = vmatpush1.msra.mxu0 %v67
    %211 = vmatprep.subr.mxu0 0.0
    %212 = vmatpush1.msra.mxu0 %v68
    %213 = vmatprep.subr.mxu0 0.0
    %214 = vmatpush1.msra.mxu0 %v69
    %215 = vmatprep.subr.mxu0 0.0
    %216 = vmatpush1.msra.mxu0 %v70
    %217 = vmatprep.subr.mxu0 0.0
    %218 = vmatpush1.msra.mxu0 %v71
    %219 = vmatprep.subr.mxu0 0.0
    %220 = vmatpush1.msra.mxu0 %v72
    %221 = vmatprep.subr.mxu0 0.0
    %222 = vmatpush1.msra.mxu0 %v73
    %223 = vmatprep.subr.mxu0 0.0
    %224 = vmatpush1.msra.mxu0 %v74
    %225 = vmatprep.subr.mxu0 0.0
    %226 = vmatpush1.msra.mxu0 %v75
    %227 = vmatprep.subr.mxu0 0.0
    %228 = vmatpush1.msra.mxu0 %v76
    %229 = vmatprep.subr.mxu0 0.0
    %230 = vmatpush1.msra.mxu0 %v77
    %231 = vmatprep.subr.mxu0 0.0
    %232 = vmatpush1.msra.mxu0 %v78
    %233 = vmatprep.subr.mxu0 0.0
    %234 = vmatpush1.msra.mxu0 %v79
    %235 = vmatprep.subr.mxu0 0.0
    %236 = vmatpush1.msra.mxu0 %v80
    %237 = vmatprep.subr.mxu0 0.0
    %238 = vmatpush1.msra.mxu0 %v81
    %239 = vmatprep.subr.mxu0 0.0
    %240 = vmatpush1.msra.mxu0 %v82
    %241 = vmatprep.subr.mxu0 0.0
    %242 = vmatpush1.msra.mxu0 %v83
    %243 = vmatprep.subr.mxu0 0.0
    %244 = vmatpush1.msra.mxu0 %v84
    %245 = vmatprep.subr.mxu0 0.0
    %246 = vmatpush1.msra.mxu0 %v85
    %247 = vmatprep.subr.mxu0 0.0
    %248 = vmatpush1.msra.mxu0 %v86
    %249 = vmatprep.subr.mxu0 0.0
    %250 = vmatpush1.msra.mxu0 %v87
    %251 = vmatprep.subr.mxu0 0.0
    %252 = vmatpush1.msra.mxu0 %v88
    %253 = vmatprep.subr.mxu0 0.0
    %254 = vmatpush1.msra.mxu0 %v89
    %255 = vmatprep.subr.mxu0 0.0
    %256 = vmatpush1.msra.mxu0 %v90
    %257 = vmatprep.subr.mxu0 0.0
    %258 = vmatpush1.msra.mxu0 %v91
    %259 = vmatprep.mubr.f32.mxu0 %v53
    %260 = vmatmul.mubr.f32.gmra.mrb[0].mxu0 %v52
    %v261 = vpop.f32.mrb[0].mxu0
    %v262 = vadd.f32 %v193, %v261
    %v263 = vpop.f32.mrb[0].mxu0
    %264 = vdwg.mxu0
    %265 = vmatprep.subr.mxu0 0.0
    %266 = vmatpush1.msra.mxu0 %v92
    %267 = vmatprep.subr.mxu0 0.0
    %268 = vmatpush1.msra.mxu0 %v93
    %269 = vmatprep.subr.mxu0 0.0
    %270 = vmatpush1.msra.mxu0 %v94
    %271 = vmatprep.subr.mxu0 0.0
    %272 = vmatpush1.msra.mxu0 %v95
    %273 = vmatprep.subr.mxu0 0.0
    %274 = vmatpush1.msra.mxu0 %v96
    %275 = vmatprep.subr.mxu0 0.0
    %276 = vmatpush1.msra.mxu0 %v97
    %277 = vmatprep.subr.mxu0 0.0
    %278 = vmatpush1.msra.mxu0 %v98
    %279 = vmatprep.subr.mxu0 0.0
    %280 = vmatpush1.msra.mxu0 %v99
    %281 = vmatprep.subr.mxu0 0.0
    %282 = vmatpush1.msra.mxu0 %v100
    %283 = vmatprep.subr.mxu0 0.0
    %284 = vmatpush1.msra.mxu0 %v101
    %285 = vmatprep.subr.mxu0 0.0
    %286 = vmatpush1.msra.mxu0 %v102
    %287 = vmatprep.subr.mxu0 0.0
    %288 = vmatpush1.msra.mxu0 %v103
    %289 = vmatprep.subr.mxu0 0.0
    %290 = vmatpush1.msra.mxu0 %v104
    %291 = vmatprep.subr.mxu0 0.0
    %292 = vmatpush1.msra.mxu0 %v105
    %293 = vmatprep.subr.mxu0 0.0
    %294 = vmatpush1.msra.mxu0 %v106
    %295 = vmatprep.subr.mxu0 0.0
    %296 = vmatpush1.msra.mxu0 %v107
    %297 = vmatprep.subr.mxu0 0.0
    %298 = vmatpush1.msra.mxu0 %v108
    %299 = vmatprep.subr.mxu0 0.0
    %300 = vmatpush1.msra.mxu0 %v109
    %301 = vmatprep.subr.mxu0 0.0
    %302 = vmatpush1.msra.mxu0 %v110
    %303 = vmatprep.subr.mxu0 0.0
    %304 = vmatpush1.msra.mxu0 %v111
    %305 = vmatprep.subr.mxu0 0.0
    %306 = vmatpush1.msra.mxu0 %v112
    %307 = vmatprep.subr.mxu0 0.0
    %308 = vmatpush1.msra.mxu0 %v113
    %309 = vmatprep.subr.mxu0 0.0
    %310 = vmatpush1.msra.mxu0 %v114
    %311 = vmatprep.subr.mxu0 0.0
    %312 = vmatpush1.msra.mxu0 %v115
    %313 = vmatprep.subr.mxu0 0.0
    %314 = vmatpush1.msra.mxu0 %v116
    %315 = vmatprep.subr.mxu0 0.0
    %316 = vmatpush1.msra.mxu0 %v117
    %317 = vmatprep.subr.mxu0 0.0
    %318 = vmatpush1.msra.mxu0 %v118
    %319 = vmatprep.subr.mxu0 0.0
    %320 = vmatpush1.msra.mxu0 %v119
    %321 = vmatprep.subr.mxu0 0.0
    %322 = vmatpush1.msra.mxu0 %v120
    %323 = vmatprep.subr.mxu0 0.0
    %324 = vmatpush1.msra.mxu0 %v121
    %325 = vmatprep.subr.mxu0 0.0
    %326 = vmatpush1.msra.mxu0 %v122
    %327 = vmatprep.subr.mxu0 0.0
    %328 = vmatpush1.msra.mxu0 %v123
    %329 = vmatprep.mubr.f32.mxu0 %v55
    %330 = vmatmul.mubr.f32.gmra.mrb[0].mxu0 %v54
    %v331 = vpop.f32.mrb[0].mxu0
    %v332 = vadd.f32 %v262, %v331
    %v333 = vpop.f32.mrb[0].mxu0
    %334 = vdwg.mxu0
    %335 = vmatprep.subr.mxu0 0.0
    %336 = vmatpush1.msra.mxu0 %v124
    %337 = vmatprep.subr.mxu0 0.0
    %338 = vmatpush1.msra.mxu0 %v125
    %339 = vmatprep.subr.mxu0 0.0
    %340 = vmatpush1.msra.mxu0 %v126
    %341 = vmatprep.subr.mxu0 0.0
    %342 = vmatpush1.msra.mxu0 %v127
    %343 = vmatprep.subr.mxu0 0.0
    %344 = vmatpush1.msra.mxu0 %v128
    %345 = vmatprep.subr.mxu0 0.0
    %346 = vmatpush1.msra.mxu0 %v129
    %347 = vmatprep.subr.mxu0 0.0
    %348 = vmatpush1.msra.mxu0 %v130
    %349 = vmatprep.subr.mxu0 0.0
    %350 = vmatpush1.msra.mxu0 %v131
    %351 = vmatprep.subr.mxu0 0.0
    %352 = vmatpush1.msra.mxu0 %v132
    %353 = vmatprep.subr.mxu0 0.0
    %354 = vmatpush1.msra.mxu0 %v133
    %355 = vmatprep.subr.mxu0 0.0
    %356 = vmatpush1.msra.mxu0 %v134
    %357 = vmatprep.subr.mxu0 0.0
    %358 = vmatpush1.msra.mxu0 %v135
    %359 = vmatprep.subr.mxu0 0.0
    %360 = vmatpush1.msra.mxu0 %v136
    %361 = vmatprep.subr.mxu0 0.0
    %362 = vmatpush1.msra.mxu0 %v137
    %363 = vmatprep.subr.mxu0 0.0
    %364 = vmatpush1.msra.mxu0 %v138
    %365 = vmatprep.subr.mxu0 0.0
    %366 = vmatpush1.msra.mxu0 %v139
    %367 = vmatprep.subr.mxu0 0.0
    %368 = vmatpush1.msra.mxu0 %v140
    %369 = vmatprep.subr.mxu0 0.0
    %370 = vmatpush1.msra.mxu0 %v141
    %371 = vmatprep.subr.mxu0 0.0
    %372 = vmatpush1.msra.mxu0 %v142
    %373 = vmatprep.subr.mxu0 0.0
    %374 = vmatpush1.msra.mxu0 %v143
    %375 = vmatprep.subr.mxu0 0.0
    %376 = vmatpush1.msra.mxu0 %v144
    %377 = vmatprep.subr.mxu0 0.0
    %378 = vmatpush1.msra.mxu0 %v145
    %379 = vmatprep.subr.mxu0 0.0
    %380 = vmatpush1.msra.mxu0 %v146
    %381 = vmatprep.subr.mxu0 0.0
    %382 = vmatpush1.msra.mxu0 %v147
    %383 = vmatprep.subr.mxu0 0.0
    %384 = vmatpush1.msra.mxu0 %v148
    %385 = vmatprep.subr.mxu0 0.0
    %386 = vmatpush1.msra.mxu0 %v149
    %387 = vmatprep.subr.mxu0 0.0
    %388 = vmatpush1.msra.mxu0 %v150
    %389 = vmatprep.subr.mxu0 0.0
    %390 = vmatpush1.msra.mxu0 %v151
    %391 = vmatprep.subr.mxu0 0.0
    %392 = vmatpush1.msra.mxu0 %v152
    %393 = vmatprep.subr.mxu0 0.0
    %394 = vmatpush1.msra.mxu0 %v153
    %395 = vmatprep.subr.mxu0 0.0
    %396 = vmatpush1.msra.mxu0 %v154
    %397 = vmatprep.subr.mxu0 0.0
    %398 = vmatpush1.msra.mxu0 %v155
    %399 = vmatprep.mubr.f32.mxu0 %v57
    %400 = vmatmul.mubr.f32.gmra.mrb[0].mxu0 %v56
    %v401 = vpop.f32.mrb[0].mxu0
    %v402 = vadd.f32 %v332, %v401
    %v403 = vpop.f32.mrb[0].mxu0
    %404 = vdwg.mxu0
    %405 = vmatprep.subr.mxu0 0.0
    %406 = vmatpush1.msra.mxu0 %v156
    %407 = vmatprep.subr.mxu0 0.0
    %408 = vmatpush1.msra.mxu0 %v157
    %409 = vmatprep.subr.mxu0 0.0
    %410 = vmatpush1.msra.mxu0 %v158
    %411 = vmatprep.subr.mxu0 0.0
    %412 = vmatpush1.msra.mxu0 %v159
    %413 = vmatprep.subr.mxu0 0.0
    %414 = vmatpush1.msra.mxu0 %v160
    %415 = vmatprep.subr.mxu0 0.0
    %416 = vmatpush1.msra.mxu0 %v161
    %417 = vmatprep.subr.mxu0 0.0
    %418 = vmatpush1.msra.mxu0 %v162
    %419 = vmatprep.subr.mxu0 0.0
    %420 = vmatpush1.msra.mxu0 %v163
    %421 = vmatprep.subr.mxu0 0.0
    %422 = vmatpush1.msra.mxu0 %v164
    %423 = vmatprep.subr.mxu0 0.0
    %424 = vmatpush1.msra.mxu0 %v165
    %425 = vmatprep.subr.mxu0 0.0
    %426 = vmatpush1.msra.mxu0 %v166
    %427 = vmatprep.subr.mxu0 0.0
    %428 = vmatpush1.msra.mxu0 %v167
    %429 = vmatprep.subr.mxu0 0.0
    %430 = vmatpush1.msra.mxu0 %v168
    %431 = vmatprep.subr.mxu0 0.0
    %432 = vmatpush1.msra.mxu0 %v169
    %433 = vmatprep.subr.mxu0 0.0
    %434 = vmatpush1.msra.mxu0 %v170
    %435 = vmatprep.subr.mxu0 0.0
    %436 = vmatpush1.msra.mxu0 %v171
    %437 = vmatprep.subr.mxu0 0.0
    %438 = vmatpush1.msra.mxu0 %v172
    %439 = vmatprep.subr.mxu0 0.0
    %440 = vmatpush1.msra.mxu0 %v173
    %441 = vmatprep.subr.mxu0 0.0
    %442 = vmatpush1.msra.mxu0 %v174
    %443 = vmatprep.subr.mxu0 0.0
    %444 = vmatpush1.msra.mxu0 %v175
    %445 = vmatprep.subr.mxu0 0.0
    %446 = vmatpush1.msra.mxu0 %v176
    %447 = vmatprep.subr.mxu0 0.0
    %448 = vmatpush1.msra.mxu0 %v177
    %449 = vmatprep.subr.mxu0 0.0
    %450 = vmatpush1.msra.mxu0 %v178
    %451 = vmatprep.subr.mxu0 0.0
    %452 = vmatpush1.msra.mxu0 %v179
    %453 = vmatprep.subr.mxu0 0.0
    %454 = vmatpush1.msra.mxu0 %v180
    %455 = vmatprep.subr.mxu0 0.0
    %456 = vmatpush1.msra.mxu0 %v181
    %457 = vmatprep.subr.mxu0 0.0
    %458 = vmatpush1.msra.mxu0 %v182
    %459 = vmatprep.subr.mxu0 0.0
    %460 = vmatpush1.msra.mxu0 %v183
    %461 = vmatprep.subr.mxu0 0.0
    %462 = vmatpush1.msra.mxu0 %v184
    %463 = vmatprep.subr.mxu0 0.0
    %464 = vmatpush1.msra.mxu0 %v185
    %465 = vmatprep.subr.mxu0 0.0
    %466 = vmatpush1.msra.mxu0 %v186
    %467 = vmatprep.subr.mxu0 0.0
    %468 = vmatpush1.msra.mxu0 %v187
    %469 = vmatprep.mubr.f32.mxu0 %v59
    %470 = vmatmul.mubr.f32.gmra.mrb[0].mxu0 %v58
    %v471 = vpop.f32.mrb[0].mxu0
    %v472 = vadd.f32 %v402, %v471
    %v473 = vpop.f32.mrb[0].mxu0
    %474 = vdwg.mxu0
    %475 = vst [vmem:[#allocation8] sm:$0xff] %v472
    // Predicated region
    $region26: #{normalization_forward.1} parent=1 // pred_check
      _
    $region27: #{normalization_forward.1} parent=1 // pred_check_branch
      %477 = sbr.rel (0) target = $region29
    $region28: #{normalization_forward.1} parent=1 // pred_region
      %s479 = ssub.s32 128, 128
      %480 = vsyncadd [#allocation4], %s479
      %s482 = sshll.u32 [#allocation8], 4
      %s483 = int_to_ptr.vmem [resolvable:$true] %s482
      %485 = dma.vmem_to_hbm [thread:$0]  %s483, 128, %s3, [#allocation4]
    $region29: #{normalization_forward.1} parent=1 // pred_fallthru
      _
    // Predicated region
    $region30: #{normalization_forward.1} parent=1 // pred_check
      _
    $region31: #{normalization_forward.1} parent=1 // pred_check_branch
      %487 = sbr.rel (0) target = $region33
    $region32: #{normalization_forward.1} parent=1 // pred_region
      %488 = dma.done [#allocation4], 128
    $region33: #{normalization_forward.1} parent=1 // pred_fallthru
      _
    %489 = vsyncpa [#allocation3], 1
    %490 = vsyncpa [#allocation6], 1
    %491 = vsyncpa [#allocation4], 1

</llo_original>
